<compile_context>
chip_gen: v7x
topology: tpu7x:2x2x1
jax: 0.10.0
libtpu: 0.0.40
codegen_flags: <defaults>
</compile_context>

<pallas_src>
import functools

import jax
import jax.numpy as jnp
from jax import lax
from jax.experimental import pallas as pl
from jax.experimental.pallas import tpu as pltpu


def _temporal_shift_linear_kernel(x_ref, w_ref, b_ref, o_ref, *,
                                  stride, fold, bidirectional, padding):
    # x_ref: (TB, L, D) f32    w_ref: (D, TH) compute dtype (already cast)
    # b_ref: (1, TH) f32       o_ref: (TB, L, TH)
    TB, L, D = x_ref.shape
    M = TB * L

    # Fold (TB, L) -> M so the MXU sees a tall LHS tile.  L is a multiple of 8
    # and D a multiple of 128, so merging the leading dims is a layout no-op.
    x = x_ref[...].reshape(M, D)

    # Time-within-clip and feature indices (iota hoisted, computed once/step).
    t = lax.broadcasted_iota(jnp.int32, (TB, L, D), 1).reshape(M, D)
    col = lax.broadcasted_iota(jnp.int32, (M, D), 1)

    # Forward shift: out[l] = x[l - stride].  Rolling the flattened (M, D)
    # array pulls the previous clip's tail into rows with t < stride, but
    # those are exactly the rows the padding mask overwrites, so it is safe.
    fwd = pltpu.roll(x, shift=stride, axis=0)
    if padding == 'zero':
        fwd = jnp.where(t >= stride, fwd, 0.0)
    else:  # 'repeat'
        # TODO(synk): PyTorch 'repeat' performs an in-place overlapping copy;
        # we implement the functional semantics (RHS read from the original x).
        fwd = jnp.where(t >= stride, fwd, x)

    if bidirectional:
        # Backward shift: out[l] = x[l + stride]  (roll by -stride == M-stride).
        bwd = pltpu.roll(x, shift=M - stride, axis=0)
        if padding == 'zero':
            bwd = jnp.where(t < L - stride, bwd, 0.0)
        else:
            bwd = jnp.where(t < L - stride, bwd, x)
        shifted = jnp.where(col < fold, fwd,
                            jnp.where(col < 2 * fold, bwd, x))
    else:
        shifted = jnp.where(col < fold, fwd, x)

    # net = nn.Linear(D, H):  y = shifted @ W^T + b.  Operands in bf16 (or the
    # caller-chosen compute dtype), f32 accumulation, f32 bias add.
    a = shifted.astype(w_ref.dtype)
    y = jnp.dot(a, w_ref[...], preferred_element_type=jnp.float32)
    y = y + b_ref[...].astype(jnp.float32)
    o_ref[...] = y.reshape(TB, L, -1).astype(o_ref.dtype)


def _pick_batch_tile(B, L, D, H, *, target_rows=512, vmem_budget=8 << 20):
    """Smallest divisor of B with tile_rows >= target_rows, shrunk to budget."""
    divisors = [d for d in range(1, B + 1) if B % d == 0]
    tb = next((d for d in divisors if d * L >= target_rows), B)
    # Keep double-buffered f32 activation + output tiles within a VMEM budget.
    while tb > 1 and tb * L * (D + H) * 4 * 2 > vmem_budget:
        tb = max(d for d in divisors if d < tb)
    return tb


def _pick_h_tile(H):
    """Largest multiple of 128 dividing H (capped at 512) -> lane-dense stores."""
    if H % 128 != 0:
        return H
    for th in (512, 384, 256, 128):
        if H % th == 0:
            return th
    return H


def temporal_shift_linear(x, w_t, b, *, stride=1, n_div=8, bidirectional=False,
                          padding='zero', batch_tile=None, h_tile=None,
                          compute_dtype=jnp.bfloat16):
    """Fused TemporalShift + nn.Linear(D, H).

    x:   (B, L, D) float32
    w_t: (D, H)    = W^T of the wrapped nn.Linear
    b:   (H,) or (1, H)
    """
    assert padding in ('zero', 'repeat'), 'Unkown shift type'
    B, L, D = x.shape
    H = w_t.shape[1]
    fold = D // n_div
    assert 0 < stride < L, "stride must satisfy 0 < stride < L"

    if batch_tile is None:
        batch_tile = _pick_batch_tile(B, L, D, H)
    if h_tile is None:
        h_tile = _pick_h_tile(H)
    assert B % batch_tile == 0 and H % h_tile == 0

    w_t = w_t.astype(compute_dtype)            # MXU operand dtype (bf16 peak)
    b = jnp.asarray(b, jnp.float32).reshape(1, H)

    kernel = functools.partial(
        _temporal_shift_linear_kernel, stride=stride, fold=fold,
        bidirectional=bidirectional, padding=padding)

    # TODO(synk): for very large D a K/reduction grid axis with an f32 VMEM
    # accumulator (pl.when init/finalize) would be needed; D is untiled here.
    grid = (B // batch_tile, H // h_tile)
    return pl.pallas_call(
        kernel,
        out_shape=jax.ShapeDtypeStruct((B, L, H), x.dtype),
        grid_spec=pltpu.PrefetchScalarGridSpec(
            num_scalar_prefetch=0,
            grid=grid,
            in_specs=[
                pl.BlockSpec((batch_tile, L, D), lambda i, j: (i, 0, 0)),
                pl.BlockSpec((D, h_tile), lambda i, j: (0, j)),
                pl.BlockSpec((1, h_tile), lambda i, j: (0, j)),
            ],
            out_specs=pl.BlockSpec((batch_tile, L, h_tile),
                                   lambda i, j: (i, 0, j)),
        ),
        compiler_params=pltpu.CompilerParams(
            dimension_semantics=("parallel", "parallel"),
            vmem_limit_bytes=64 * 1024 * 1024,
        ),
    )(x, w_t, b)


# ---------------- pure-JAX reference (mirrors the PyTorch code) -------------
def _shift_ref(x, stride, n_div, bidirectional, padding):
    B, L, D = x.shape
    fold = D // n_div
    if padding == 'zero':
        out = jnp.zeros_like(x)
        if bidirectional:
            out = out.at[:, stride:, :fold].set(x[:, :-stride, :fold])
            out = out.at[:, :-stride, fold:2 * fold].set(x[:, stride:, fold:2 * fold])
            if n_div != 2:
                out = out.at[:, :, 2 * fold:].set(x[:, :, 2 * fold:])
        else:
            out = out.at[:, stride:, :fold].set(x[:, :-stride, :fold])
            out = out.at[:, :, fold:].set(x[:, :, fold:])
    else:  # 'repeat' (functional semantics, see TODO in the kernel)
        out = x
        if bidirectional:
            out = out.at[:, stride:, :fold].set(x[:, :-stride, :fold])
            out = out.at[:, :-stride, fold:2 * fold].set(x[:, stride:, fold:2 * fold])
        else:
            out = out.at[:, stride:, :fold].set(x[:, :-stride, :fold])
    return out


def _forward_ref(x, w_torch, b, stride, n_div, bidirectional, padding,
                 compute_dtype=jnp.bfloat16):
    s = _shift_ref(x, stride, n_div, bidirectional, padding)
    # Match the kernel's numerics: bf16-rounded operands, f32 accumulation.
    s = s.astype(compute_dtype).astype(jnp.float32)
    w = w_torch.T.astype(compute_dtype).astype(jnp.float32)
    return s @ w + b.astype(jnp.float32)


if __name__ == "__main__":
    B, L, D, H = 4, 16, 128, 128

    key = jax.random.PRNGKey(0)
    kx, kw, kb = jax.random.split(key, 3)
    x = jax.random.normal(kx, (B, L, D), dtype=jnp.float32)
    # Deterministic synthetic nn.Linear(D, H) parameters (PyTorch layout: (H, D))
    w_torch = jax.random.normal(kw, (H, D), dtype=jnp.float32) * (1.0 / jnp.sqrt(D))
    b = jax.random.normal(kb, (H,), dtype=jnp.float32) * 0.01

    configs = [
        dict(stride=1, n_div=8, bidirectional=False, padding='zero'),
        dict(stride=1, n_div=8, bidirectional=True, padding='zero'),
        dict(stride=2, n_div=4, bidirectional=True, padding='repeat'),
    ]
    for cfg in configs:
        out = temporal_shift_linear(x, jnp.transpose(w_torch), b, **cfg)
        out = jax.block_until_ready(out)
        ref = _forward_ref(x, w_torch, b, **cfg)
        assert out.shape == (B, L, H)
        assert jnp.allclose(out, ref, atol=2e-3, rtol=2e-3), f"mismatch vs reference: {cfg}"

    print("KERNEL_OK")
</pallas_src>

<mosaic_0001>
module attributes {stable_mosaic.version = 11 : i64} {
  func.func @_temporal_shift_linear_kernel(%arg0: i32, %arg1: i32, %arg2: memref<4x16x128xf32, #tpu.memory_space<vmem>>, %arg3: memref<128x128xbf16, #tpu.memory_space<vmem>>, %arg4: memref<1x128xf32, #tpu.memory_space<vmem>>, %arg5: memref<4x16x128xf32, #tpu.memory_space<vmem>>) attributes {dimension_semantics = [#tpu.dimension_semantics<parallel>, #tpu.dimension_semantics<parallel>], iteration_bounds = array<i64: 1, 1>, scalar_prefetch = 0 : i64, scratch_operands = 0 : i64, tpu.core_type = #tpu.core_type<tc>, window_params = [{transform_indices = @transform_0, window_bounds = array<i64: 4, 16, 128>}, {transform_indices = @transform_1, window_bounds = array<i64: 128, 128>}, {transform_indices = @transform_2, window_bounds = array<i64: 1, 128>}, {transform_indices = @transform_3, window_bounds = array<i64: 4, 16, 128>}]} {
    %c0 = arith.constant 0 : index
    %c0_0 = arith.constant 0 : index
    %c0_1 = arith.constant 0 : index
    %0 = vector.load %arg2[%c0, %c0_0, %c0_1] : memref<4x16x128xf32, #tpu.memory_space<vmem>>, vector<4x16x128xf32>
    %1 = vector.shape_cast %0 : vector<4x16x128xf32> to vector<64x128xf32>
    %2 = tpu.iota {dimensions = array<i32: 1>} : vector<4x16x128xi32>
    %3 = vector.shape_cast %2 : vector<4x16x128xi32> to vector<64x128xi32>
    %4 = tpu.iota {dimensions = array<i32: 1>} : vector<64x128xi32>
    %c1_i32 = arith.constant 1 : i32
    %5 = tpu.dynamic_rotate %1 by %c1_i32 dim 0 : vector<64x128xf32>, i32 -> vector<64x128xf32>
    %c1_i32_2 = arith.constant 1 : i32
    %6 = vector.broadcast %c1_i32_2 : i32 to vector<64x128xi32>
    %7 = arith.cmpi sge, %3, %6 : vector<64x128xi32>
    %cst = arith.constant 0.000000e+00 : f32
    %8 = vector.broadcast %cst : f32 to vector<64x128xf32>
    %9 = arith.select %7, %5, %8 : vector<64x128xi1>, vector<64x128xf32>
    %c16_i32 = arith.constant 16 : i32
    %10 = vector.broadcast %c16_i32 : i32 to vector<64x128xi32>
    %11 = arith.cmpi slt, %4, %10 : vector<64x128xi32>
    %12 = arith.select %11, %9, %1 : vector<64x128xi1>, vector<64x128xf32>
    %13 = arith.truncf %12 : vector<64x128xf32> to vector<64x128xbf16>
    %c0_3 = arith.constant 0 : index
    %c0_4 = arith.constant 0 : index
    %14 = vector.load %arg3[%c0_3, %c0_4] : memref<128x128xbf16, #tpu.memory_space<vmem>>, vector<128x128xbf16>
    %cst_5 = arith.constant dense<0.000000e+00> : vector<64x128xf32>
    %15 = tpu.matmul %13, %14, %cst_5 {dimension_numbers = #tpu.dot_dimension_numbers<[1], [0], [0], [1], [0, 0, 1, 1], [], []>} : vector<64x128xbf16>, vector<128x128xbf16>, vector<64x128xf32> -> vector<64x128xf32>
    %c0_6 = arith.constant 0 : index
    %c0_7 = arith.constant 0 : index
    %16 = vector.load %arg4[%c0_6, %c0_7] : memref<1x128xf32, #tpu.memory_space<vmem>>, vector<1x128xf32>
    %17 = vector.broadcast %16 : vector<1x128xf32> to vector<64x128xf32>
    %18 = arith.addf %15, %17 : vector<64x128xf32>
    %19 = vector.shape_cast %18 : vector<64x128xf32> to vector<4x16x128xf32>
    %c0_8 = arith.constant 0 : index
    %c0_9 = arith.constant 0 : index
    %c0_10 = arith.constant 0 : index
    %20 = vector.load %arg5[%c0_8, %c0_9, %c0_10] : memref<4x16x128xf32, #tpu.memory_space<vmem>>, vector<4x16x128xf32>
    tpu.vector_store %arg5[%c0_8, %c0_9, %c0_10], %19 {strides = array<i32>} : memref<4x16x128xf32, #tpu.memory_space<vmem>>, vector<4x16x128xf32>,
    return
  }
  func.func @transform_0(%arg0: i32, %arg1: i32) -> (i32, i32, i32) {
    %c0_i32 = arith.constant 0 : i32
    %c0_i32_0 = arith.constant 0 : i32
    %c0_i32_1 = arith.constant 0 : i32
    return %arg0, %c0_i32, %c0_i32_0 : i32, i32, i32
  }
  func.func @transform_1(%arg0: i32, %arg1: i32) -> (i32, i32) {
    %c0_i32 = arith.constant 0 : i32
    %c0_i32_0 = arith.constant 0 : i32
    return %c0_i32, %arg1 : i32, i32
  }
  func.func @transform_2(%arg0: i32, %arg1: i32) -> (i32, i32) {
    %c0_i32 = arith.constant 0 : i32
    %c0_i32_0 = arith.constant 0 : i32
    return %c0_i32, %arg1 : i32, i32
  }
  func.func @transform_3(%arg0: i32, %arg1: i32) -> (i32, i32, i32) {
    %c0_i32 = arith.constant 0 : i32
    %c0_i32_0 = arith.constant 0 : i32
    return %arg0, %c0_i32, %arg1 : i32, i32, i32
  }
}

</mosaic_0001>

<llo_original>
// kernel: tpu_custom_call.1
$region0: #{tpu_custom_call.1}
  #allocation0 [shape = 'u32[]', space=smem, size = 0x4, offset = 0x4, fixed_abs, tag = 'smem constant byte address 0x4 - core index']
  #allocation1 [shape = 'u32[144,128]{1,0:T(1,128)}', space=vmem, size = 0x12000, scoped, tag = 'internal scratch']
  %s0 = inlined_call_operand.hbm [shape: f32[4,16,128], index: 0, kind: input, shape index: {}]
  %s1 = inlined_call_operand.hbm [shape: bf16[128,128], index: 1, kind: input, shape index: {}]
  %s2 = inlined_call_operand.hbm [shape: f32[1,128], index: 2, kind: input, shape index: {}]
  %s3 = inlined_call_operand.hbm [shape: f32[4,16,128], index: 3, kind: output, shape index: {}]
  %s4 = sld [smem:[#allocation0]]
  $region34: #{tpu_custom_call.1} parent=0
    _
  %s6 = ssub.s32 1, %s4
  %s7 = scalar_select 0, %s6, %s4
  $region1: #{tpu_custom_call.1} parent=0
    #allocation2 [shape = 'u8[32768]{0}', space=vmem, size = 0x8000, scoped, tag = 'input window, operand 0, single buffered']
    #allocation3 [shape = 's32[1]{0}', space=sflag, size = 0x4, scoped, tag = 'scoped memory for tpu_custom_call.1']
    #allocation4 [shape = 's32[1]{0}', space=sflag, size = 0x4, scoped, tag = 'scoped memory for tpu_custom_call.1']
    #allocation5 [shape = 'u8[32768]{0}', space=vmem, size = 0x8000, scoped, tag = 'input window, operand 1, single buffered']
    #allocation6 [shape = 's32[1]{0}', space=sflag, size = 0x4, scoped, tag = 'scoped memory for tpu_custom_call.1']
    #allocation7 [shape = 'u8[512]{0}', space=vmem, size = 0x400, scoped, tag = 'input window, operand 2, single buffered']
    #allocation8 [shape = 'u8[32768]{0}', space=vmem, size = 0x8000, scoped, tag = 'output window, operand 0, single buffered']
    %8 = vsyncpa [#allocation3], 0
    %9 = vsyncpa [#allocation6], 0
    %10 = vsyncpa [#allocation4], 0
    // Predicated region
    $region2: #{tpu_custom_call.1} parent=1 // pred_check
      _
    $region3: #{tpu_custom_call.1} parent=1 // pred_check_branch
      %12 = sbr.rel (0) target = $region5
    $region4: #{tpu_custom_call.1} parent=1 // pred_region
      %s14 = ssub.s32 1024, 1024
      %15 = vsyncadd [#allocation3], %s14
      %s16 = sshll.u32 [#allocation2], 4
      %s17 = int_to_ptr.vmem [resolvable:$true] %s16
      %22 = dma.hbm_to_vmem [thread:$0]  %s0, 1024, %s17, [#allocation3], 128, 128, 8
    $region5: #{tpu_custom_call.1} parent=1 // pred_fallthru
      _
    // Predicated region
    $region6: #{tpu_custom_call.1} parent=1 // pred_check
      _
    $region7: #{tpu_custom_call.1} parent=1 // pred_check_branch
      %24 = sbr.rel (0) target = $region9
    $region8: #{tpu_custom_call.1} parent=1 // pred_region
      %s26 = ssub.s32 1024, 1024
      %27 = vsyncadd [#allocation6], %s26
      %s28 = sshll.u32 [#allocation5], 4
      %s29 = int_to_ptr.vmem [resolvable:$true] %s28
      %34 = dma.hbm_to_vmem [thread:$0]  %s1, 1024, %s29, [#allocation6], 64, 64, 4
    $region9: #{tpu_custom_call.1} parent=1 // pred_fallthru
      _
    // Predicated region
    $region10: #{tpu_custom_call.1} parent=1 // pred_check
      _
    $region11: #{tpu_custom_call.1} parent=1 // pred_check_branch
      %36 = sbr.rel (0) target = $region13
    $region12: #{tpu_custom_call.1} parent=1 // pred_region
      %s38 = ssub.s32 16, 16
      %39 = vsyncadd [#allocation6], %s38
      %s41 = sshll.u32 [#allocation7], 4
      %s42 = int_to_ptr.vmem [resolvable:$true] %s41
      %44 = dma.hbm_to_vmem [thread:$0]  %s2, 16, %s42, [#allocation6]
    $region13: #{tpu_custom_call.1} parent=1 // pred_fallthru
      _
    // Predicated region
    $region14: #{tpu_custom_call.1} parent=1 // pred_check
      _
    $region15: #{tpu_custom_call.1} parent=1 // pred_check_branch
      %46 = sbr.rel (0) target = $region17
    $region16: #{tpu_custom_call.1} parent=1 // pred_region
      %47 = dma.done [#allocation3], 1024
    $region17: #{tpu_custom_call.1} parent=1 // pred_fallthru
      _
    // Predicated region
    $region18: #{tpu_custom_call.1} parent=1 // pred_check
      _
    $region19: #{tpu_custom_call.1} parent=1 // pred_check_branch
      %49 = sbr.rel (0) target = $region21
    $region20: #{tpu_custom_call.1} parent=1 // pred_region
      %50 = dma.done [#allocation6], 1024
    $region21: #{tpu_custom_call.1} parent=1 // pred_fallthru
      _
    // Predicated region
    $region22: #{tpu_custom_call.1} parent=1 // pred_check
      _
    $region23: #{tpu_custom_call.1} parent=1 // pred_check_branch
      %52 = sbr.rel (0) target = $region25
    $region24: #{tpu_custom_call.1} parent=1 // pred_region
      %53 = dma.done [#allocation6], 16
    $region25: #{tpu_custom_call.1} parent=1 // pred_fallthru
      _
    %v55 = vld [vmem:[#allocation2] sm:$0xff]
    %v56 = vld [vmem:[#allocation2 + $0x8] sm:$0xff]
    %v57 = vld [vmem:[#allocation2 + $0x10] sm:$0xff]
    %v58 = vld [vmem:[#allocation2 + $0x18] sm:$0xff]
    %v59 = vld [vmem:[#allocation2 + $0x20] sm:$0xff]
    %v60 = vld [vmem:[#allocation2 + $0x28] sm:$0xff]
    %v61 = vld [vmem:[#allocation2 + $0x30] sm:$0xff]
    %v62 = vld [vmem:[#allocation2 + $0x38] sm:$0xff]
    %v63 = vlaneseq
    %v64 = vshrl.u32 %v63, 7
    %v65 = vadd.s32 %v64, 8
    %v66 = vlaneseq
    %v67 = vand.u32 %v66, 127
    %v68 = vrot.slane %v55, 7
    %v69 = vrot.slane %v56, 7
    %v70 = vrot.slane %v57, 7
    %v71 = vrot.slane %v58, 7
    %v72 = vrot.slane %v59, 7
    %v73 = vrot.slane %v60, 7
    %v74 = vrot.slane %v61, 7
    %v75 = vrot.slane %v62, 7
    %vm76 = vcmp.lt.s32.totalorder %v64, 1
    %v77 = vsel %vm76, %v74, %v75
    %v78 = vsel %vm76, %v73, %v74
    %v79 = vsel %vm76, %v72, %v73
    %v80 = vsel %vm76, %v71, %v72
    %v81 = vsel %vm76, %v70, %v71
    %v82 = vsel %vm76, %v69, %v70
    %v83 = vsel %vm76, %v68, %v69
    %v84 = vsel %vm76, %v75, %v68
    %vm85 = vcmp.ge.s32.totalorder %v64, 1
    %vm86 = vcmp.ge.s32.totalorder %v65, 1
    %v87 = vsel %vm85, %v84, 0.0
    %v88 = vsel %vm86, %v83, 0.0
    %v89 = vsel %vm85, %v82, 0.0
    %v90 = vsel %vm86, %v81, 0.0
    %v91 = vsel %vm85, %v80, 0.0
    %v92 = vsel %vm86, %v79, 0.0
    %v93 = vsel %vm85, %v78, 0.0
    %v94 = vsel %vm86, %v77, 0.0
    %vm95 = vcmp.lt.s32.totalorder %v67, 16
    %v96 = vsel %vm95, %v87, %v55
    %v97 = vsel %vm95, %v88, %v56
    %v98 = vsel %vm95, %v89, %v57
    %v99 = vsel %vm95, %v90, %v58
    %v100 = vsel %vm95, %v91, %v59
    %v101 = vsel %vm95, %v92, %v60
    %v102 = vsel %vm95, %v93, %v61
    %v103 = vsel %vm95, %v94, %v62
    %v104 = vpack.c.bf16 %v97, %v96
    %v105 = vpack.c.bf16 %v99, %v98
    %v106 = vpack.c.bf16 %v101, %v100
    %v107 = vpack.c.bf16 %v103, %v102
    %v108 = vld [vmem:[#allocation5] sm:$0xf]
    %v109 = vld [vmem:[#allocation5 + $0x4] sm:$0xf]
    %v110 = vld [vmem:[#allocation5 + $0x8] sm:$0xf]
    %v111 = vld [vmem:[#allocation5 + $0xc] sm:$0xf]
    %v112 = vld [vmem:[#allocation5 + $0x10] sm:$0xf]
    %v113 = vld [vmem:[#allocation5 + $0x14] sm:$0xf]
    %v114 = vld [vmem:[#allocation5 + $0x18] sm:$0xf]
    %v115 = vld [vmem:[#allocation5 + $0x1c] sm:$0xf]
    %v116 = vld [vmem:[#allocation5 + $0x20] sm:$0xf]
    %v117 = vld [vmem:[#allocation5 + $0x24] sm:$0xf]
    %v118 = vld [vmem:[#allocation5 + $0x28] sm:$0xf]
    %v119 = vld [vmem:[#allocation5 + $0x2c] sm:$0xf]
    %v120 = vld [vmem:[#allocation5 + $0x30] sm:$0xf]
    %v121 = vld [vmem:[#allocation5 + $0x34] sm:$0xf]
    %v122 = vld [vmem:[#allocation5 + $0x38] sm:$0xf]
    %v123 = vld [vmem:[#allocation5 + $0x3c] sm:$0xf]
    %v124 = vld [vmem:[#allocation7] sm:$0x1]
    %v126 = vlaneseq
    %v127 = vshrl.u32 %v126, 7
    %v128 = vsub.s32 0, %v127
    %v129 = vrot.slane %v124, %v128
    %v147 = vunpack.c.l.b16 %v108
    %v148 = vunpack.c.l.b16 %v109
    %v149 = vunpack.c.l.b16 %v110
    %v150 = vunpack.c.l.b16 %v111
    %v151 = vunpack.c.l.b16 %v112
    %v152 = vunpack.c.l.b16 %v113
    %v153 = vunpack.c.l.b16 %v114
    %v154 = vunpack.c.l.b16 %v115
    %v155 = vunpack.c.l.b16 %v116
    %v156 = vunpack.c.l.b16 %v117
    %v157 = vunpack.c.l.b16 %v118
    %v158 = vunpack.c.l.b16 %v119
    %v159 = vunpack.c.l.b16 %v120
    %v160 = vunpack.c.l.b16 %v121
    %v161 = vunpack.c.l.b16 %v122
    %v162 = vunpack.c.l.b16 %v123
    %v163 = vpack.c.b16 %v148, %v147
    %v164 = vpack.c.b16 %v150, %v149
    %v165 = vpack.c.b16 %v152, %v151
    %v166 = vpack.c.b16 %v154, %v153
    %v167 = vpack.c.b16 %v156, %v155
    %v168 = vpack.c.b16 %v158, %v157
    %v169 = vpack.c.b16 %v160, %v159
    %v170 = vpack.c.b16 %v162, %v161
    %179 = vmatprep.subr.bf16.mxu0 0
    %180 = vmatpush1.bf16.msra.mxu0 %v163
    %181 = vmatprep.subr.bf16.mxu0 0
    %182 = vmatpush1.bf16.msra.mxu0 %v164
    %183 = vmatprep.subr.bf16.mxu0 0
    %184 = vmatpush1.bf16.msra.mxu0 %v165
    %185 = vmatprep.subr.bf16.mxu0 0
    %186 = vmatpush1.bf16.msra.mxu0 %v166
    %187 = vmatprep.subr.bf16.mxu0 0
    %188 = vmatpush1.bf16.msra.mxu0 %v167
    %189 = vmatprep.subr.bf16.mxu0 0
    %190 = vmatpush1.bf16.msra.mxu0 %v168
    %191 = vmatprep.subr.bf16.mxu0 0
    %192 = vmatpush1.bf16.msra.mxu0 %v169
    %193 = vmatprep.subr.bf16.mxu0 0
    %194 = vmatpush1.bf16.msra.mxu0 %v170
    %195 = vmatprep.subr.bf16.mxu0 0
    %196 = vmatpush1.bf16.msra.mxu0 0
    %197 = vmatprep.subr.bf16.mxu0 0
    %198 = vmatpush1.bf16.msra.mxu0 0
    %199 = vmatprep.subr.bf16.mxu0 0
    %200 = vmatpush1.bf16.msra.mxu0 0
    %201 = vmatprep.subr.bf16.mxu0 0
    %202 = vmatpush1.bf16.msra.mxu0 0
    %203 = vmatprep.subr.bf16.mxu0 0
    %204 = vmatpush1.bf16.msra.mxu0 0
    %205 = vmatprep.subr.bf16.mxu0 0
    %206 = vmatpush1.bf16.msra.mxu0 0
    %207 = vmatprep.subr.bf16.mxu0 0
    %208 = vmatpush1.bf16.msra.mxu0 0
    %209 = vmatprep.subr.bf16.mxu0 0
    %210 = vmatpush1.bf16.msra.mxu0 0
    %211 = vmatprep.mubr.bf16.mxu0 0
    %212 = vmatmul.mubr.bf16.gmra.mrb[0].mxu0 %v104
    %v213 = vpop.f32.mrb[0].mxu0
    %v214 = vadd.f32 %v129, %v213
    %v215 = vpop.f32.mrb[0].mxu0
    %v216 = vpop.f32.mrb[0].mxu0
    %v217 = vadd.f32 %v129, %v216
    %v218 = vpop.f32.mrb[0].mxu0
    %219 = vmatprep.mubr.bf16.mxu0 0
    %220 = vmatmul.mubr.bf16.gmra.mrb[0].mxu0 %v105
    %v221 = vpop.f32.mrb[0].mxu0
    %v222 = vadd.f32 %v129, %v221
    %v223 = vpop.f32.mrb[0].mxu0
    %v224 = vpop.f32.mrb[0].mxu0
    %v225 = vadd.f32 %v129, %v224
    %v226 = vpop.f32.mrb[0].mxu0
    %227 = vmatprep.mubr.bf16.mxu0 0
    %228 = vmatmul.mubr.bf16.gmra.mrb[0].mxu0 %v106
    %v229 = vpop.f32.mrb[0].mxu0
    %v230 = vadd.f32 %v129, %v229
    %v231 = vpop.f32.mrb[0].mxu0
    %v232 = vpop.f32.mrb[0].mxu0
    %v233 = vadd.f32 %v129, %v232
    %v234 = vpop.f32.mrb[0].mxu0
    %235 = vmatprep.mubr.bf16.mxu0 0
    %236 = vmatmul.mubr.bf16.gmra.mrb[0].mxu0 %v107
    %v237 = vpop.f32.mrb[0].mxu0
    %v238 = vadd.f32 %v129, %v237
    %v239 = vpop.f32.mrb[0].mxu0
    %v240 = vpop.f32.mrb[0].mxu0
    %v241 = vadd.f32 %v129, %v240
    %v242 = vpop.f32.mrb[0].mxu0
    %243 = vdwg.mxu0
    %244 = vst [vmem:[#allocation8] sm:$0xff] %v214
    %245 = vst [vmem:[#allocation8 + $0x8] sm:$0xff] %v217
    %246 = vst [vmem:[#allocation8 + $0x10] sm:$0xff] %v222
    %247 = vst [vmem:[#allocation8 + $0x18] sm:$0xff] %v225
    %248 = vst [vmem:[#allocation8 + $0x20] sm:$0xff] %v230
    %249 = vst [vmem:[#allocation8 + $0x28] sm:$0xff] %v233
    %250 = vst [vmem:[#allocation8 + $0x30] sm:$0xff] %v238
    %251 = vst [vmem:[#allocation8 + $0x38] sm:$0xff] %v241
    // Predicated region
    $region26: #{tpu_custom_call.1} parent=1 // pred_check
      _
    $region27: #{tpu_custom_call.1} parent=1 // pred_check_branch
      %253 = sbr.rel (0) target = $region29
    $region28: #{tpu_custom_call.1} parent=1 // pred_region
      %s255 = ssub.s32 1024, 1024
      %256 = vsyncadd [#allocation4], %s255
      %s257 = sshll.u32 [#allocation8], 4
      %s258 = int_to_ptr.vmem [resolvable:$true] %s257
      %263 = dma.vmem_to_hbm [thread:$0]  %s258, 1024, %s3, [#allocation4], 128, 128, 8
    $region29: #{tpu_custom_call.1} parent=1 // pred_fallthru
      _
    // Predicated region
    $region30: #{tpu_custom_call.1} parent=1 // pred_check
      _
    $region31: #{tpu_custom_call.1} parent=1 // pred_check_branch
      %265 = sbr.rel (0) target = $region33
    $region32: #{tpu_custom_call.1} parent=1 // pred_region
      %266 = dma.done [#allocation4], 1024
    $region33: #{tpu_custom_call.1} parent=1 // pred_fallthru
      _
    %267 = vsyncpa [#allocation3], 1
    %268 = vsyncpa [#allocation6], 1
    %269 = vsyncpa [#allocation4], 1

</llo_original>
